<compile_context>
chip_gen: v5e
topology: v5e:2x2
jax: 0.10.0
libtpu: 0.0.40
codegen_flags: <defaults>
</compile_context>

<pallas_src>
import jax
import jax.numpy as jnp
from jax.experimental import pallas as pl
from jax.experimental.pallas import tpu as pltpu


_CHUNK_THRESHOLD_BYTES = 1 << 20  # only bother with multiple in-flight DMAs above 1 MiB
_MAX_DMA_CHUNKS = 4


def noop(x: jax.Array) -> jax.Array:
    """NoOp.forward: identity. Zero kernels, zero HBM traffic."""
    return x


def _pallas_identity_copy(x: jax.Array) -> jax.Array:
    """Identity realized as a fresh materialized copy via direct HBM->HBM DMA.

    Only useful when a new buffer is explicitly required; otherwise use `noop`,
    which moves zero bytes.
    """
    if x.size == 0:
        return jnp.array(x)

    shape = x.shape
    itemsize = jnp.dtype(x.dtype).itemsize
    total_bytes = x.size * itemsize

    # Decide how many DMA chunks to issue (static, along the leading axis).
    if len(shape) >= 1 and shape[0] >= 2 and total_bytes >= _CHUNK_THRESHOLD_BYTES:
        n_chunks = min(_MAX_DMA_CHUNKS, shape[0])
    else:
        n_chunks = 1

    if n_chunks > 1:
        d0 = shape[0]
        base, rem = divmod(d0, n_chunks)
        starts, sizes = [], []
        s = 0
        for i in range(n_chunks):
            sz = base + (1 if i < rem else 0)
            starts.append(s)
            sizes.append(sz)
            s += sz
    else:
        starts, sizes = [0], [None]

    def kernel(x_hbm, o_hbm, sem):
        if n_chunks == 1:
            # Single whole-array HBM->HBM DMA.
            cp = pltpu.make_async_copy(x_hbm, o_hbm, sem.at[0])
            cp.start()
            cp.wait()
        else:
            # A few chunked DMAs in flight simultaneously, then wait on all.
            copies = []
            for i in range(n_chunks):
                src = x_hbm.at[pl.ds(starts[i], sizes[i])]
                dst = o_hbm.at[pl.ds(starts[i], sizes[i])]
                cp = pltpu.make_async_copy(src, dst, sem.at[i])
                cp.start()
                copies.append(cp)
            for cp in copies:
                cp.wait()

    return pl.pallas_call(
        kernel,
        out_shape=jax.ShapeDtypeStruct(shape, x.dtype),
        in_specs=[pl.BlockSpec(memory_space=pl.ANY)],
        out_specs=pl.BlockSpec(memory_space=pl.ANY),
        scratch_shapes=[pltpu.SemaphoreType.DMA((n_chunks,))],
        cost_estimate=pl.CostEstimate(
            flops=0,
            transcendentals=0,
            bytes_accessed=2 * total_bytes,
        ),
    )(x)


if __name__ == "__main__":
    key = jax.random.PRNGKey(0)
    x = jax.random.normal(key, (2, 4, 16, 16), dtype=jnp.float32)

    # Primary (optimal) path: no kernel launched.
    y = noop(x)
    jax.block_until_ready(y)

    # Explicit Pallas HBM->HBM DMA copy path, run once to validate the kernel.
    y_copy = _pallas_identity_copy(x)
    jax.block_until_ready(y_copy)

    assert y.shape == x.shape and y.dtype == x.dtype, (y.shape, y.dtype)
    assert y_copy.shape == x.shape and y_copy.dtype == x.dtype, (y_copy.shape, y_copy.dtype)
    assert bool(jnp.all(y == x)), "NoOp output differs from input"
    assert bool(jnp.all(y_copy == x)), "Pallas copy output differs from input"

    print("KERNEL_OK")
</pallas_src>

<mosaic_0001>
module attributes {stable_mosaic.version = 11 : i64} {
  func.func @kernel(%arg0: memref<2x4x16x16xf32, #tpu.memory_space<any>>, %arg1: memref<2x4x16x16xf32, #tpu.memory_space<any>>, %arg2: memref<1x!tpu.dma_semaphore, #tpu.memory_space<semaphore_mem>>) attributes {dimension_semantics = [], scalar_prefetch = 0 : i64, scratch_operands = 1 : i64, tpu.core_type = #tpu.core_type<tc>} {
    %c0_i32 = arith.constant 0 : i32
    %0 = tpu.memref_slice %arg2[%c0_i32] : memref<1x!tpu.dma_semaphore, #tpu.memory_space<semaphore_mem>> -> memref<1x!tpu.dma_semaphore, #tpu.memory_space<semaphore_mem>>
    %1 = tpu.memref_squeeze %0 : memref<1x!tpu.dma_semaphore, #tpu.memory_space<semaphore_mem>> -> memref<!tpu.dma_semaphore, #tpu.memory_space<semaphore_mem>>
    tpu.enqueue_dma source(%arg0 : memref<2x4x16x16xf32, #tpu.memory_space<any>>) target(%arg1 : memref<2x4x16x16xf32, #tpu.memory_space<any>>) target_semaphore(%1 : memref<!tpu.dma_semaphore, #tpu.memory_space<semaphore_mem>>)
    %c0_i32_0 = arith.constant 0 : i32
    %2 = tpu.memref_slice %arg2[%c0_i32_0] : memref<1x!tpu.dma_semaphore, #tpu.memory_space<semaphore_mem>> -> memref<1x!tpu.dma_semaphore, #tpu.memory_space<semaphore_mem>>
    %3 = tpu.memref_squeeze %2 : memref<1x!tpu.dma_semaphore, #tpu.memory_space<semaphore_mem>> -> memref<!tpu.dma_semaphore, #tpu.memory_space<semaphore_mem>>
    tpu.wait_dma2 semaphore(%3 : memref<!tpu.dma_semaphore, #tpu.memory_space<semaphore_mem>>) src(%arg0 : memref<2x4x16x16xf32, #tpu.memory_space<any>>) dst(%arg1 : memref<2x4x16x16xf32, #tpu.memory_space<any>>)
    return
  }
}

</mosaic_0001>

<llo_original>
// kernel: tpu_custom_call.1
$region0: #{tpu_custom_call.1}
  #allocation0 [shape = 'u32[]', space=smem, size = 0x4, offset = 0x4, fixed_abs, tag = 'smem constant byte address 0x4 - core index']
  #allocation1 [shape = 'u32[72,128]{1,0:T(1,128)}', space=vmem, size = 0x9000, scoped, tag = 'internal scratch']
  #allocation2 [shape = 's32[1]{0}', space=sflag, size = 0x4, scoped, tag = 'scratch operand']
  #allocation3 [shape = 's32[]', space=sflag, size = 0x4, offset = 0, fixed_abs, tag = 'sflag constant byte address 0x0 - dummy sync flag']
  #allocation4 [shape = 'u32[0]{0}', space=smem, size = 0, offset = 0, fixed_abs, tag = 'smem constant byte address 0x0 - null']
  %s0 = inlined_call_operand.hbm [shape: f32[2,4,16,16], index: 0, kind: input, shape index: {}]
  %s1 = inlined_call_operand.hbm [shape: f32[2,4,16,16], index: 1, kind: output, shape index: {}]
  %s2 = sld [smem:[#allocation0]]
  $region2: #{tpu_custom_call.1} parent=0
    _
  %s4 = ssub.s32 1, %s2
  %s5 = scalar_select 0, %s4, %s2
  %s7 = sshll.u32 1, 14
  %s8 = sxor.u32 4294967295, %s7
  %s10 = sshll.u32 %s0, 4
  %s11 = int_to_ptr.hbm [resolvable:$true] %s10
  %s12 = sshll.u32 %s1, 4
  %s13 = int_to_ptr.hbm [resolvable:$true] %s12
  %16 = dma.general %s11, 2048, %s13, [#allocation2], [#allocation3], [#allocation4], 0, 0
  %s17 = smul.u32 2, 4
  %s18 = smul.u32 %s17, 16
  %s19 = smul.u32 %s18, 1
  %s20 = sshll.u32 %s19, 4
  %21 = dma.done [#allocation2], %s20
  %22 = vsyncmov [#allocation2]
  %s23 = vpop.sfrf %22
  %p24 = scmp.eq.s32.totalorder %s23, 0
  %p25 = pneg %p24
  %27 = shalt.err (%p25)

</llo_original>
